<compile_context>
chip_gen: v7x
topology: tpu7x:2x2x1
jax: 0.10.0
libtpu: 0.0.40
codegen_flags: <defaults>
</compile_context>

<pallas_src>
import math

import jax
import jax.numpy as jnp
from jax.experimental import pallas as pl
from jax.experimental.pallas import tpu as pltpu


def _scale_shift_kernel(wb_ref, x_ref, o_ref):
    x = x_ref[...].astype(jnp.float32)
    w = wb_ref[0:1, :]
    b = wb_ref[1:2, :]
    o_ref[...] = (x * w + b).astype(o_ref.dtype)


def _scale_kernel(w_ref, x_ref, o_ref):
    x = x_ref[...].astype(jnp.float32)
    o_ref[...] = (x * w_ref[...]).astype(o_ref.dtype)


def _round_up(n, m):
    return ((n + m - 1) // m) * m


_LANE = 128
_MAX_FOLD_LANES = 8192            # cap on lcm-fold lane width
_TARGET_TILE_BYTES = 4 * 1024 * 1024


def projector_layer(x, weight, bias=None, *, tile_rows=None):
    """y = weight * x (+ bias), broadcasting weight/bias over the last axis of x."""
    orig_shape = x.shape
    dim = orig_shape[-1]
    assert weight.shape == (dim,)
    has_bias = bias is not None
    if has_bias:
        assert bias.shape == (dim,)

    dtypes = [x.dtype, weight.dtype] + ([bias.dtype] if has_bias else [])
    out_dtype = jnp.result_type(*dtypes)

    n_total = math.prod(orig_shape) if orig_shape else 1
    if n_total == 0 or not jnp.issubdtype(out_dtype, jnp.floating):
        # TODO(synk): integer / empty inputs use plain jnp (the kernel computes
        # in f32, which would not preserve exact integer semantics).
        y = weight.astype(out_dtype) * x.astype(out_dtype)
        if has_bias:
            y = y + bias.astype(out_dtype)
        return y

    w_f32 = weight.astype(jnp.float32)
    b_f32 = bias.astype(jnp.float32) if has_bias else None

    # ---- Lane-dense layout selection (contiguous reshapes only, no copies) ----
    if dim % _LANE == 0:
        lane_dim = dim
        x2 = x.reshape(-1, lane_dim)
        w_lane, b_lane = w_f32, b_f32
    else:
        fold_lanes = (dim * _LANE) // math.gcd(dim, _LANE)   # lcm(dim, 128)
        if fold_lanes <= _MAX_FOLD_LANES and n_total % fold_lanes == 0:
            lane_dim = fold_lanes
            reps = lane_dim // dim
            x2 = x.reshape(-1, lane_dim)
            w_lane = jnp.tile(w_f32, reps)
            b_lane = jnp.tile(b_f32, reps) if has_bias else None
        else:
            # Native layout: block spans the full (irregular) last dim.
            lane_dim = dim
            x2 = x.reshape(-1, lane_dim)
            w_lane, b_lane = w_f32, b_f32

    rows = x2.shape[0]
    in_itemsize = jnp.dtype(x.dtype).itemsize
    out_itemsize = jnp.dtype(out_dtype).itemsize
    # Sublane quantum of the narrowest dtype involved (f32: 8, bf16: 16, ...).
    sub_mult = 32 // min(in_itemsize, out_itemsize)

    if tile_rows is None:
        tr = _TARGET_TILE_BYTES // (lane_dim * max(in_itemsize, out_itemsize))
        tile_rows = max(sub_mult, (tr // sub_mult) * sub_mult)
    tile_rows = max(sub_mult, (tile_rows // sub_mult) * sub_mult)
    tile_rows = min(tile_rows, _round_up(rows, sub_mult))

    grid = (pl.cdiv(rows, tile_rows),)

    if has_bias:
        params = jnp.stack([w_lane, b_lane])                  # (2, lane_dim) f32
        kernel = _scale_shift_kernel
        p_spec = pl.BlockSpec((2, lane_dim), lambda i: (0, 0))
    else:
        params = w_lane.reshape(1, lane_dim)                  # (1, lane_dim) f32
        kernel = _scale_kernel
        p_spec = pl.BlockSpec((1, lane_dim), lambda i: (0, 0))

    x_spec = pl.BlockSpec((tile_rows, lane_dim), lambda i: (i, 0))
    o_spec = pl.BlockSpec((tile_rows, lane_dim), lambda i: (i, 0))

    tile_in = tile_rows * lane_dim * in_itemsize
    tile_out = tile_rows * lane_dim * out_itemsize
    vmem_limit = int(min(48 << 20,
                         max(16 << 20,
                             2 * (tile_in + tile_out) + (2 << 20))))

    n_params = 2 if has_bias else 1
    cost = pl.CostEstimate(
        flops=n_params * rows * lane_dim,
        transcendentals=0,
        bytes_accessed=(rows * lane_dim * (in_itemsize + out_itemsize)
                        + n_params * lane_dim * 4),
    )

    out = pl.pallas_call(
        kernel,
        out_shape=jax.ShapeDtypeStruct((rows, lane_dim), out_dtype),
        grid_spec=pltpu.PrefetchScalarGridSpec(
            num_scalar_prefetch=0,
            grid=grid,
            in_specs=[p_spec, x_spec],
            out_specs=o_spec,
        ),
        compiler_params=pltpu.CompilerParams(
            # "parallel": shards the row axis across both TensorCores on v7x;
            # harmless no-op on single-TC v5e/v6e.
            dimension_semantics=("parallel",),
            vmem_limit_bytes=vmem_limit,
        ),
        cost_estimate=cost,
    )(params, x2)

    # rows * lane_dim == numel(x) in every layout -> free reshape.
    return out.reshape(orig_shape)


if __name__ == "__main__":
    key = jax.random.PRNGKey(0)

    # Main check: shapes implied by the module (batch=2, seq=8, dim=32).
    batch, seq, dim = 2, 8, 32
    kx, kw, kb = jax.random.split(key, 3)
    x = jax.random.normal(kx, (batch, seq, dim), dtype=jnp.float32)
    weight = jax.random.normal(kw, (dim,), dtype=jnp.float32)
    bias = jax.random.normal(kb, (dim,), dtype=jnp.float32)

    y = jax.block_until_ready(projector_layer(x, weight, bias))
    assert y.shape == x.shape
    assert jnp.allclose(y, weight * x + bias, atol=1e-6), "mismatch (dim=32)"

    # Default init of ProjectorLayer (ones / zeros) must be identity.
    y_id = jax.block_until_ready(
        projector_layer(x, jnp.ones((dim,), jnp.float32), jnp.zeros((dim,), jnp.float32)))
    assert jnp.allclose(y_id, x, atol=1e-6), "identity init mismatch"

    # bias=False path (dedicated kernel variant).
    y_nb = jax.block_until_ready(projector_layer(x, weight, None))
    assert jnp.allclose(y_nb, weight * x, atol=1e-6), "no-bias mismatch"

    # dim multiple of 128 (direct lane-dense path).
    dim2 = 256
    x2 = jax.random.normal(kx, (2, 8, dim2), dtype=jnp.float32)
    w2 = jax.random.normal(kw, (dim2,), dtype=jnp.float32)
    b2 = jax.random.normal(kb, (dim2,), dtype=jnp.float32)
    y2 = jax.block_until_ready(projector_layer(x2, w2, b2))
    assert jnp.allclose(y2, w2 * x2 + b2, atol=1e-6), "mismatch (dim=256)"

    # Irregular dim, lcm-fold path (lcm(48,128)=384 divides numel).
    dim3 = 48
    x3 = jax.random.normal(kx, (2, 8, dim3), dtype=jnp.float32)
    w3 = jax.random.normal(kw, (dim3,), dtype=jnp.float32)
    b3 = jax.random.normal(kb, (dim3,), dtype=jnp.float32)
    y3 = jax.block_until_ready(projector_layer(x3, w3, b3))
    assert jnp.allclose(y3, w3 * x3 + b3, atol=1e-6), "mismatch (dim=48 fold)"

    # Irregular dim, native masked-store path (numel not divisible by lcm).
    x4 = jax.random.normal(kx, (3, 5, dim3), dtype=jnp.float32)
    y4 = jax.block_until_ready(projector_layer(x4, w3, b3))
    assert jnp.allclose(y4, w3 * x4 + b3, atol=1e-6), "mismatch (dim=48 native)"

    # Ragged row grid (rows % tile_rows != 0) with multi-step grid.
    dim5 = 128
    x5 = jax.random.normal(kx, (3, 7, dim5), dtype=jnp.float32)
    w5 = jax.random.normal(kw, (dim5,), dtype=jnp.float32)
    b5 = jax.random.normal(kb, (dim5,), dtype=jnp.float32)
    y5 = jax.block_until_ready(projector_layer(x5, w5, b5, tile_rows=8))
    assert jnp.allclose(y5, w5 * x5 + b5, atol=1e-6), "mismatch (ragged rows)"

    # Mixed dtype (bf16 activations, f32 params -> f32 output).
    x6 = jax.random.normal(kx, (2, 8, dim), dtype=jnp.bfloat16)
    y6 = jax.block_until_ready(projector_layer(x6, weight, bias))
    assert y6.dtype == jnp.float32
    assert jnp.allclose(y6, weight * x6 + bias, atol=1e-6), "mismatch (bf16 x)"

    print("KERNEL_OK")
</pallas_src>

<mosaic_0001>
module attributes {stable_mosaic.version = 11 : i64} {
  func.func @_scale_shift_kernel(%arg0: i32, %arg1: memref<2x128xf32, #tpu.memory_space<vmem>>, %arg2: memref<8x128xf32, #tpu.memory_space<vmem>>, %arg3: memref<8x128xf32, #tpu.memory_space<vmem>>) attributes {dimension_semantics = [#tpu.dimension_semantics<parallel>], iteration_bounds = array<i64: 1>, scalar_prefetch = 0 : i64, scratch_operands = 0 : i64, tpu.core_type = #tpu.core_type<tc>, window_params = [{pipeline_mode = #tpu.pipeline_mode<synchronous>, transform_indices = @transform_0, window_bounds = array<i64: 2, 128>}, {transform_indices = @transform_1, window_bounds = array<i64: 8, 128>}, {transform_indices = @transform_2, window_bounds = array<i64: 8, 128>}]} {
    %c0 = arith.constant 0 : index
    %c0_0 = arith.constant 0 : index
    %0 = vector.load %arg2[%c0, %c0_0] : memref<8x128xf32, #tpu.memory_space<vmem>>, vector<8x128xf32>
    %c0_1 = arith.constant 0 : index
    %c0_2 = arith.constant 0 : index
    %1 = vector.load %arg1[%c0_1, %c0_2] : memref<2x128xf32, #tpu.memory_space<vmem>>, vector<1x128xf32>
    %c1 = arith.constant 1 : index
    %c0_3 = arith.constant 0 : index
    %2 = vector.load %arg1[%c1, %c0_3] : memref<2x128xf32, #tpu.memory_space<vmem>>, vector<1x128xf32>
    %3 = vector.broadcast %1 : vector<1x128xf32> to vector<8x128xf32>
    %4 = arith.mulf %0, %3 : vector<8x128xf32>
    %5 = vector.broadcast %2 : vector<1x128xf32> to vector<8x128xf32>
    %6 = arith.addf %4, %5 : vector<8x128xf32>
    %c0_4 = arith.constant 0 : index
    %c0_5 = arith.constant 0 : index
    %7 = vector.load %arg3[%c0_4, %c0_5] : memref<8x128xf32, #tpu.memory_space<vmem>>, vector<8x128xf32>
    tpu.vector_store %arg3[%c0_4, %c0_5], %6 {strides = array<i32>} : memref<8x128xf32, #tpu.memory_space<vmem>>, vector<8x128xf32>,
    return
  }
  func.func @transform_0(%arg0: i32) -> (i32, i32) {
    %c0_i32 = arith.constant 0 : i32
    %c0_i32_0 = arith.constant 0 : i32
    %c0_i32_1 = arith.constant 0 : i32
    return %c0_i32, %c0_i32_0 : i32, i32
  }
  func.func @transform_1(%arg0: i32) -> (i32, i32) {
    %c0_i32 = arith.constant 0 : i32
    %c0_i32_0 = arith.constant 0 : i32
    return %arg0, %c0_i32 : i32, i32
  }
  func.func @transform_2(%arg0: i32) -> (i32, i32) {
    %c0_i32 = arith.constant 0 : i32
    %c0_i32_0 = arith.constant 0 : i32
    return %arg0, %c0_i32 : i32, i32
  }
}

</mosaic_0001>

<llo_original>
// kernel: tpu_custom_call.1
$region0: #{tpu_custom_call.1}
  #allocation0 [shape = 'u32[]', space=smem, size = 0x4, offset = 0x4, fixed_abs, tag = 'smem constant byte address 0x4 - core index']
  #allocation1 [shape = 'u32[144,128]{1,0:T(1,128)}', space=vmem, size = 0x12000, scoped, tag = 'internal scratch']
  %s0 = inlined_call_operand.hbm [shape: f32[2,128], index: 0, kind: input, shape index: {}]
  %s1 = inlined_call_operand.hbm [shape: f32[4,128], index: 1, kind: input, shape index: {}]
  %s2 = inlined_call_operand.hbm [shape: f32[4,128], index: 2, kind: output, shape index: {}]
  %s3 = sld [smem:[#allocation0]]
  $region26: #{tpu_custom_call.1} parent=0
    _
  %s5 = ssub.s32 1, %s3
  %s6 = scalar_select 0, %s5, %s3
  $region1: #{tpu_custom_call.1} parent=0
    #allocation2 [shape = 'u8[1024]{0}', space=vmem, size = 0x400, scoped, tag = 'input window, operand 0, single buffered']
    #allocation3 [shape = 's32[1]{0}', space=sflag, size = 0x4, scoped, tag = 'scoped memory for tpu_custom_call.1']
    #allocation4 [shape = 's32[1]{0}', space=sflag, size = 0x4, scoped, tag = 'scoped memory for tpu_custom_call.1']
    #allocation5 [shape = 'u8[4096]{0}', space=vmem, size = 0x1000, scoped, tag = 'input window, operand 1, single buffered']
    #allocation6 [shape = 's32[1]{0}', space=sflag, size = 0x4, scoped, tag = 'scoped memory for tpu_custom_call.1']
    #allocation7 [shape = 'u8[4096]{0}', space=vmem, size = 0x1000, scoped, tag = 'output window, operand 0, single buffered']
    %7 = vsyncpa [#allocation3], 0
    %8 = vsyncpa [#allocation6], 0
    %9 = vsyncpa [#allocation4], 0
    // Predicated region
    $region2: #{tpu_custom_call.1} parent=1 // pred_check
      _
    $region3: #{tpu_custom_call.1} parent=1 // pred_check_branch
      %11 = sbr.rel (0) target = $region5
    $region4: #{tpu_custom_call.1} parent=1 // pred_region
      %s13 = ssub.s32 32, 32
      %14 = vsyncadd [#allocation3], %s13
      %s16 = sshll.u32 [#allocation2], 4
      %s17 = int_to_ptr.vmem [resolvable:$true] %s16
      %19 = dma.hbm_to_vmem [thread:$0]  %s0, 32, %s17, [#allocation3]
    $region5: #{tpu_custom_call.1} parent=1 // pred_fallthru
      _
    // Predicated region
    $region6: #{tpu_custom_call.1} parent=1 // pred_check
      _
    $region7: #{tpu_custom_call.1} parent=1 // pred_check_branch
      %21 = sbr.rel (0) target = $region9
    $region8: #{tpu_custom_call.1} parent=1 // pred_region
      %s23 = ssub.s32 128, 64
      %24 = vsyncadd [#allocation6], %s23
      %s25 = sshll.u32 [#allocation5], 4
      %s26 = int_to_ptr.vmem [resolvable:$true] %s25
      %31 = dma.hbm_to_vmem [thread:$0]  %s1, 64, %s26, [#allocation6], 64, 64, 4
    $region9: #{tpu_custom_call.1} parent=1 // pred_fallthru
      _
    // Predicated region
    $region10: #{tpu_custom_call.1} parent=1 // pred_check
      _
    $region11: #{tpu_custom_call.1} parent=1 // pred_check_branch
      %33 = sbr.rel (0) target = $region13
    $region12: #{tpu_custom_call.1} parent=1 // pred_region
      %34 = dma.done [#allocation3], 32
    $region13: #{tpu_custom_call.1} parent=1 // pred_fallthru
      _
    // Predicated region
    $region14: #{tpu_custom_call.1} parent=1 // pred_check
      _
    $region15: #{tpu_custom_call.1} parent=1 // pred_check_branch
      %36 = sbr.rel (0) target = $region17
    $region16: #{tpu_custom_call.1} parent=1 // pred_region
      %37 = dma.done [#allocation6], 128
    $region17: #{tpu_custom_call.1} parent=1 // pred_fallthru
      _
    %v38 = vld [vmem:[#allocation5] sm:$0xff]
    %v39 = vld [vmem:[#allocation2] sm:$0x1]
    %v40 = vld [vmem:[#allocation2 + $0x1] sm:$0x1]
    %v41 = vlaneseq
    %v42 = vshrl.u32 %v41, 7
    %v43 = vsub.s32 0, %v42
    %v44 = vrot.slane %v39, %v43
    %v45 = vmul.f32 %v38, %v44
    %v46 = vlaneseq
    %v47 = vshrl.u32 %v46, 7
    %v48 = vsub.s32 0, %v47
    %v49 = vrot.slane %v40, %v48
    %v50 = vadd.f32 %v45, %v49
    %51 = vst [vmem:[#allocation7] sm:$0xff] %v50
    // Predicated region
    $region18: #{tpu_custom_call.1} parent=1 // pred_check
      _
    $region19: #{tpu_custom_call.1} parent=1 // pred_check_branch
      %53 = sbr.rel (0) target = $region21
    $region20: #{tpu_custom_call.1} parent=1 // pred_region
      %s55 = ssub.s32 128, 64
      %56 = vsyncadd [#allocation4], %s55
      %s57 = sshll.u32 [#allocation7], 4
      %s58 = int_to_ptr.vmem [resolvable:$true] %s57
      %63 = dma.vmem_to_hbm [thread:$0]  %s58, 64, %s2, [#allocation4], 64, 64, 4
    $region21: #{tpu_custom_call.1} parent=1 // pred_fallthru
      _
    // Predicated region
    $region22: #{tpu_custom_call.1} parent=1 // pred_check
      _
    $region23: #{tpu_custom_call.1} parent=1 // pred_check_branch
      %65 = sbr.rel (0) target = $region25
    $region24: #{tpu_custom_call.1} parent=1 // pred_region
      %66 = dma.done [#allocation4], 128
    $region25: #{tpu_custom_call.1} parent=1 // pred_fallthru
      _
    %67 = vsyncpa [#allocation3], 1
    %68 = vsyncpa [#allocation6], 1
    %69 = vsyncpa [#allocation4], 1

</llo_original>
